<compile_context>
chip_gen: v7x
topology: tpu7x:2x2x1
jax: 0.10.0
libtpu: 0.0.40
codegen_flags: <defaults>
</compile_context>

<pallas_src>
import functools

import jax
import jax.numpy as jnp
import numpy as np
from jax import lax
from jax.experimental import pallas as pl
from jax.experimental.pallas import tpu as pltpu


# ----------------------------- Pallas kernel ------------------------------- #

def _contrastive_loss_kernel(temp_ref, emb_i_ref, emb_j_ref, loss_ref, *,
                             batch_size):
    b = batch_size
    n = 2 * b

    # Concatenate the two views: (2B, D). (Sublane-aligned concat: B = 8.)
    z = jnp.concatenate([emb_i_ref[...], emb_j_ref[...]], axis=0)

    # Row-wise L2 normalization (F.normalize(dim=1), eps=1e-12).
    sq = jnp.sum(z * z, axis=1, keepdims=True)                  # (2B, 1)
    z = z * lax.rsqrt(jnp.maximum(sq, 1e-24))

    # Cosine-similarity matrix. Rows are unit norm, so it is the Gram matrix.
    # DEFAULT precision (single MXU pass) + f32 accumulation.
    sim = jnp.einsum("nd,md->nm", z, z,
                     preferred_element_type=jnp.float32)        # (2B, 2B)

    inv_t = 1.0 / temp_ref[0, 0]                                # SMEM scalar
    logits = sim * inv_t

    row = lax.broadcasted_iota(jnp.int32, (n, n), 0)
    col = lax.broadcasted_iota(jnp.int32, (n, n), 1)
    pos_mask = jnp.logical_or(col == row + b, col == row - b)   # one per row
    not_self = row != col                                       # negatives_mask

    # positives[r] = logits[r, (r+B) mod 2B]  (exactly one True per row)
    positives = jnp.sum(jnp.where(pos_mask, logits, 0.0),
                        axis=1, keepdims=True)                  # (2B, 1)
    # denominator[r] = sum_{c != r} exp(logits[r, c])
    denom = jnp.sum(jnp.where(not_self, jnp.exp(logits), 0.0),
                    axis=1, keepdims=True)                      # (2B, 1)

    # -log( exp(pos) / denom ) = log(denom) - pos
    loss_rows = jnp.log(denom) - positives                      # (2B, 1)
    total = jnp.sum(loss_rows, axis=0, keepdims=True)           # (1, 1)
    loss_ref[...] = (total * (1.0 / n)).astype(loss_ref.dtype)


# ------------------------------- wrapper ------------------------------------ #

@jax.jit
def contrastive_loss(emb_i, emb_j, temperature):
    """NT-Xent loss, fused in one Pallas TPU kernel. Returns a scalar."""
    b, _ = emb_i.shape
    temp = jnp.asarray(temperature, jnp.float32).reshape(1, 1)
    kernel = functools.partial(_contrastive_loss_kernel, batch_size=b)
    out = pl.pallas_call(
        kernel,
        out_shape=jax.ShapeDtypeStruct((1, 1), jnp.float32),
        in_specs=[
            pl.BlockSpec(memory_space=pltpu.MemorySpace.SMEM),   # temperature
            pl.BlockSpec(memory_space=pltpu.MemorySpace.VMEM),   # emb_i
            pl.BlockSpec(memory_space=pltpu.MemorySpace.VMEM),   # emb_j
        ],
        out_specs=pl.BlockSpec(memory_space=pltpu.MemorySpace.VMEM),
    )(temp, emb_i.astype(jnp.float32), emb_j.astype(jnp.float32))
    return out[0, 0]


# --------------------------- reference (numpy, f64) ------------------------- #

def _ref_loss_numpy(emb_i, emb_j, temperature, batch_size):
    emb_i = np.asarray(emb_i, np.float64)
    emb_j = np.asarray(emb_j, np.float64)
    z_i = emb_i / np.maximum(np.linalg.norm(emb_i, axis=1, keepdims=True), 1e-12)
    z_j = emb_j / np.maximum(np.linalg.norm(emb_j, axis=1, keepdims=True), 1e-12)
    reps = np.concatenate([z_i, z_j], axis=0)
    sim = reps @ reps.T
    b = batch_size
    positives = np.concatenate([np.diag(sim, b), np.diag(sim, -b)])
    nominator = np.exp(positives / temperature)
    mask = 1.0 - np.eye(2 * b)
    denominator = np.sum(mask * np.exp(sim / temperature), axis=1)
    loss_partial = -np.log(nominator / denominator)
    return float(np.sum(loss_partial) / (2 * b))


# ---------------------------------- main ------------------------------------ #

if __name__ == "__main__":
    batch_size = 8
    hidden = 32
    temperature = 0.5

    key = jax.random.PRNGKey(0)
    k1, k2 = jax.random.split(key)
    emb_i = jax.random.normal(k1, (batch_size, hidden), jnp.float32)
    emb_j = jax.random.normal(k2, (batch_size, hidden), jnp.float32)

    loss = contrastive_loss(emb_i, emb_j, jnp.float32(temperature))
    loss = jax.block_until_ready(loss)

    ref = _ref_loss_numpy(np.asarray(emb_i), np.asarray(emb_j),
                          temperature, batch_size)

    # DEFAULT-precision MXU matmul uses bf16 passes with f32 accumulation, so
    # allow ~1% slack vs. the float64 reference (loss magnitude ~3).
    np.testing.assert_allclose(float(loss), ref, rtol=2e-2, atol=2e-2)

    print("KERNEL_OK")
</pallas_src>

<mosaic_0001>
module attributes {stable_mosaic.version = 11 : i64} {
  func.func @_contrastive_loss_kernel(%arg0: memref<1x1xf32, #tpu.memory_space<smem>>, %arg1: memref<8x32xf32, #tpu.memory_space<vmem>>, %arg2: memref<8x32xf32, #tpu.memory_space<vmem>>, %arg3: memref<1x1xf32, #tpu.memory_space<vmem>>) attributes {dimension_semantics = [], scalar_prefetch = 0 : i64, scratch_operands = 0 : i64, tpu.core_type = #tpu.core_type<tc>} {
    %c0 = arith.constant 0 : index
    %c0_0 = arith.constant 0 : index
    %0 = vector.load %arg1[%c0, %c0_0] : memref<8x32xf32, #tpu.memory_space<vmem>>, vector<8x32xf32>
    %c0_1 = arith.constant 0 : index
    %c0_2 = arith.constant 0 : index
    %1 = vector.load %arg2[%c0_1, %c0_2] : memref<8x32xf32, #tpu.memory_space<vmem>>, vector<8x32xf32>
    %2 = tpu.concatenate %0, %1 in 0 : vector<8x32xf32>, vector<8x32xf32> -> vector<16x32xf32>
    %3 = arith.mulf %2, %2 : vector<16x32xf32>
    %cst = arith.constant dense<0.000000e+00> : vector<16xf32>
    %4 = vector.multi_reduction <add>, %3, %cst [1] : vector<16x32xf32> to vector<16xf32>
    %5 = vector.shape_cast %4 : vector<16xf32> to vector<16x1xf32>
    %cst_3 = arith.constant 1.000000e-24 : f32
    %6 = vector.broadcast %cst_3 : f32 to vector<16x1xf32>
    %7 = arith.maximumf %5, %6 : vector<16x1xf32>
    %8 = math.rsqrt %7 : vector<16x1xf32>
    %9 = vector.broadcast %8 : vector<16x1xf32> to vector<16x32xf32>
    %10 = arith.mulf %2, %9 : vector<16x32xf32>
    "tpu.trace_start"() <{level = 10 : i32, message = "nd,md->nm"}> : () -> ()
    %cst_4 = arith.constant dense<0.000000e+00> : vector<16x16xf32>
    %11 = tpu.matmul %10, %10, %cst_4 {dimension_numbers = #tpu.dot_dimension_numbers<[1], [1], [0], [0], [0, 0, 1, 0], [], []>} : vector<16x32xf32>, vector<16x32xf32>, vector<16x16xf32> -> vector<16x16xf32>
    "tpu.trace_stop"() : () -> ()
    %c0_5 = arith.constant 0 : index
    %c0_6 = arith.constant 0 : index
    %12 = memref.load %arg0[%c0_5, %c0_6] : memref<1x1xf32, #tpu.memory_space<smem>>
    %cst_7 = arith.constant 1.000000e+00 : f32
    %13 = arith.divf %cst_7, %12 : f32
    %14 = vector.broadcast %13 : f32 to vector<16x16xf32>
    %15 = arith.mulf %11, %14 : vector<16x16xf32>
    %16 = tpu.iota {dimensions = array<i32: 0>} : vector<16x16xi32>
    %17 = tpu.iota {dimensions = array<i32: 1>} : vector<16x16xi32>
    %c8_i32 = arith.constant 8 : i32
    %18 = vector.broadcast %c8_i32 : i32 to vector<16x16xi32>
    %19 = arith.addi %16, %18 : vector<16x16xi32>
    %20 = arith.cmpi eq, %17, %19 : vector<16x16xi32>
    %c8_i32_8 = arith.constant 8 : i32
    %21 = vector.broadcast %c8_i32_8 : i32 to vector<16x16xi32>
    %22 = arith.subi %16, %21 : vector<16x16xi32>
    %23 = arith.cmpi eq, %17, %22 : vector<16x16xi32>
    %24 = arith.ori %20, %23 : vector<16x16xi1>
    %25 = arith.cmpi ne, %16, %17 : vector<16x16xi32>
    %cst_9 = arith.constant 0.000000e+00 : f32
    %26 = vector.broadcast %cst_9 : f32 to vector<16x16xf32>
    %27 = arith.select %24, %15, %26 : vector<16x16xi1>, vector<16x16xf32>
    %cst_10 = arith.constant dense<0.000000e+00> : vector<16xf32>
    %28 = vector.multi_reduction <add>, %27, %cst_10 [1] : vector<16x16xf32> to vector<16xf32>
    %29 = vector.shape_cast %28 : vector<16xf32> to vector<16x1xf32>
    %30 = math.exp %15 : vector<16x16xf32>
    %cst_11 = arith.constant 0.000000e+00 : f32
    %31 = vector.broadcast %cst_11 : f32 to vector<16x16xf32>
    %32 = arith.select %25, %30, %31 : vector<16x16xi1>, vector<16x16xf32>
    %cst_12 = arith.constant dense<0.000000e+00> : vector<16xf32>
    %33 = vector.multi_reduction <add>, %32, %cst_12 [1] : vector<16x16xf32> to vector<16xf32>
    %34 = vector.shape_cast %33 : vector<16xf32> to vector<16x1xf32>
    %35 = math.log %34 : vector<16x1xf32>
    %36 = arith.subf %35, %29 : vector<16x1xf32>
    %cst_13 = arith.constant dense<0.000000e+00> : vector<1xf32>
    %37 = vector.multi_reduction <add>, %36, %cst_13 [0] : vector<16x1xf32> to vector<1xf32>
    %38 = vector.shape_cast %37 : vector<1xf32> to vector<1x1xf32>
    %cst_14 = arith.constant 6.250000e-02 : f32
    %39 = vector.broadcast %cst_14 : f32 to vector<1x1xf32>
    %40 = arith.mulf %38, %39 : vector<1x1xf32>
    %c0_15 = arith.constant 0 : index
    %c0_16 = arith.constant 0 : index
    %41 = vector.load %arg3[%c0_15, %c0_16] : memref<1x1xf32, #tpu.memory_space<vmem>>, vector<1x1xf32>
    tpu.vector_store %arg3[%c0_15, %c0_16], %40 {strides = array<i32>} : memref<1x1xf32, #tpu.memory_space<vmem>>, vector<1x1xf32>,
    return
  }
}

</mosaic_0001>

<llo_original>
// kernel: contrastive_loss.1
$region0: #{contrastive_loss.1}
  #allocation0 [shape = 'u32[]', space=smem, size = 0x4, offset = 0x4, fixed_abs, tag = 'smem constant byte address 0x4 - core index']
  #allocation1 [shape = 'u32[144,128]{1,0:T(1,128)}', space=vmem, size = 0x12000, scoped, tag = 'internal scratch']
  #allocation2 [shape = 'f32[1,1]{1,0:T(1,128)S(6)}', space=smem, size = 0x200, scoped, tag = 'scoped memory for contrastive_loss.1']
  %s0 = inlined_call_operand.<no memory space> [shape: f32[1,1], index: 0, kind: input, shape index: {}]
  %s1 = inlined_call_operand.hbm [shape: f32[8,32], index: 1, kind: input, shape index: {}]
  %s2 = inlined_call_operand.vmem [shape: f32[8,32], index: 2, kind: input, shape index: {}]
  %s3 = inlined_call_operand.hbm [shape: f32[1,1], index: 3, kind: output, shape index: {}]
  %s4 = sld [smem:[#allocation0]]
  $region26: #{contrastive_loss.1} parent=0
    _
  %s6 = ssub.s32 1, %s4
  %s7 = scalar_select 0, %s6, %s4
  %8 = sst [smem:[#allocation2]] %s0
  $region1: #{contrastive_loss.1} parent=0
    #allocation3 [shape = 'u8[4096]{0}', space=vmem, size = 0x1000, scoped, tag = 'input window, operand 1, single buffered']
    #allocation4 [shape = 's32[1]{0}', space=sflag, size = 0x4, scoped, tag = 'scoped memory for contrastive_loss.1']
    #allocation5 [shape = 's32[1]{0}', space=sflag, size = 0x4, scoped, tag = 'scoped memory for contrastive_loss.1']
    #allocation6 [shape = 'u8[512]{0}', space=vmem, size = 0x400, scoped, tag = 'output window, operand 0, single buffered']
    %9 = vsyncpa [#allocation4], 0
    %10 = vsyncpa [#allocation5], 0
    // Predicated region
    $region2: #{contrastive_loss.1} parent=1 // pred_check
      _
    $region3: #{contrastive_loss.1} parent=1 // pred_check_branch
      %12 = sbr.rel (0) target = $region5
    $region4: #{contrastive_loss.1} parent=1 // pred_region
      _
    $region5: #{contrastive_loss.1} parent=1 // pred_fallthru
      _
    // Predicated region
    $region6: #{contrastive_loss.1} parent=1 // pred_check
      _
    $region7: #{contrastive_loss.1} parent=1 // pred_check_branch
      %14 = sbr.rel (0) target = $region9
    $region8: #{contrastive_loss.1} parent=1 // pred_region
      %s16 = ssub.s32 128, 128
      %17 = vsyncadd [#allocation4], %s16
      %s19 = sshll.u32 [#allocation3], 4
      %s20 = int_to_ptr.vmem [resolvable:$true] %s19
      %22 = dma.hbm_to_vmem [thread:$0]  %s1, 128, %s20, [#allocation4]
    $region9: #{contrastive_loss.1} parent=1 // pred_fallthru
      _
    // Predicated region
    $region10: #{contrastive_loss.1} parent=1 // pred_check
      _
    $region11: #{contrastive_loss.1} parent=1 // pred_check_branch
      %24 = sbr.rel (0) target = $region13
    $region12: #{contrastive_loss.1} parent=1 // pred_region
      _
    $region13: #{contrastive_loss.1} parent=1 // pred_fallthru
      _
    // Predicated region
    $region14: #{contrastive_loss.1} parent=1 // pred_check
      _
    $region15: #{contrastive_loss.1} parent=1 // pred_check_branch
      %26 = sbr.rel (0) target = $region17
    $region16: #{contrastive_loss.1} parent=1 // pred_region
      %27 = dma.done [#allocation4], 128
    $region17: #{contrastive_loss.1} parent=1 // pred_fallthru
      _
    %v28 = vld [vmem:[#allocation3] sm:$0xff]
    %v29 = vld [vmem:[%s2] sm:$0xff]
    %v30 = vmul.f32 %v28, %v28
    %v31 = vmul.f32 %v29, %v29
    %vm32 = vcmask 261120
    %v33 = vsel %vm32, %v30, 0.0
    %34 = vadd.xlane.f32.xlu0 %v33
    %v35 = vpop.xlane.xlu0 %34
    %v36 = vsel %vm32, %v31, 0.0
    %37 = vadd.xlane.f32.xlu0 %v36
    %v38 = vpop.xlane.xlu0 %37
    %v39 = vmax.f32 %v35, 1e-24
    %v40 = vmax.f32 %v38, 1e-24
    %v41 = vrsqrt.pop %v39
    %v42 = vrsqrt.pop %v40
    %v43 = vmul.f32 %v28, %v41
    %v44 = vmul.f32 %v29, %v42
    %v46 = vsel %vm32, %v43, 0
    %v49 = vsel %vm32, %v44, 0
    %51 = vmatprep.subr.mxu0 0.0
    %52 = vmatpush1.xpose.msra.mxu0 %v46
    %53 = vmatprep.subr.mxu0 0.0
    %54 = vmatpush1.xpose.msra.mxu0 %v49
    %55 = vmatprep.subr.mxu0 0.0
    %56 = vmatpush1.xpose.msra.mxu0 0.0
    %57 = vmatprep.subr.mxu0 0.0
    %58 = vmatpush1.xpose.msra.mxu0 0.0
    %59 = vmatprep.subr.mxu0 0.0
    %60 = vmatpush1.xpose.msra.mxu0 0.0
    %61 = vmatprep.subr.mxu0 0.0
    %62 = vmatpush1.xpose.msra.mxu0 0.0
    %63 = vmatprep.subr.mxu0 0.0
    %64 = vmatpush1.xpose.msra.mxu0 0.0
    %65 = vmatprep.subr.mxu0 0.0
    %66 = vmatpush1.xpose.msra.mxu0 0.0
    %67 = vmatprep.subr.mxu0 0.0
    %68 = vmatpush1.xpose.msra.mxu0 0.0
    %69 = vmatprep.subr.mxu0 0.0
    %70 = vmatpush1.xpose.msra.mxu0 0.0
    %71 = vmatprep.subr.mxu0 0.0
    %72 = vmatpush1.xpose.msra.mxu0 0.0
    %73 = vmatprep.subr.mxu0 0.0
    %74 = vmatpush1.xpose.msra.mxu0 0.0
    %75 = vmatprep.subr.mxu0 0.0
    %76 = vmatpush1.xpose.msra.mxu0 0.0
    %77 = vmatprep.subr.mxu0 0.0
    %78 = vmatpush1.xpose.msra.mxu0 0.0
    %79 = vmatprep.subr.mxu0 0.0
    %80 = vmatpush1.xpose.msra.mxu0 0.0
    %81 = vmatprep.subr.mxu0 0.0
    %82 = vmatpush1.xpose.msra.mxu0 0.0
    %83 = vmatprep.subr.mxu0 0.0
    %84 = vmatpush1.xpose.msra.mxu0 0.0
    %85 = vmatprep.subr.mxu0 0.0
    %86 = vmatpush1.xpose.msra.mxu0 0.0
    %87 = vmatprep.subr.mxu0 0.0
    %88 = vmatpush1.xpose.msra.mxu0 0.0
    %89 = vmatprep.subr.mxu0 0.0
    %90 = vmatpush1.xpose.msra.mxu0 0.0
    %91 = vmatprep.subr.mxu0 0.0
    %92 = vmatpush1.xpose.msra.mxu0 0.0
    %93 = vmatprep.subr.mxu0 0.0
    %94 = vmatpush1.xpose.msra.mxu0 0.0
    %95 = vmatprep.subr.mxu0 0.0
    %96 = vmatpush1.xpose.msra.mxu0 0.0
    %97 = vmatprep.subr.mxu0 0.0
    %98 = vmatpush1.xpose.msra.mxu0 0.0
    %99 = vmatprep.subr.mxu0 0.0
    %100 = vmatpush1.xpose.msra.mxu0 0.0
    %101 = vmatprep.subr.mxu0 0.0
    %102 = vmatpush1.xpose.msra.mxu0 0.0
    %103 = vmatprep.subr.mxu0 0.0
    %104 = vmatpush1.xpose.msra.mxu0 0.0
    %105 = vmatprep.subr.mxu0 0.0
    %106 = vmatpush1.xpose.msra.mxu0 0.0
    %107 = vmatprep.subr.mxu0 0.0
    %108 = vmatpush1.xpose.msra.mxu0 0.0
    %109 = vmatprep.subr.mxu0 0.0
    %110 = vmatpush1.xpose.msra.mxu0 0.0
    %111 = vmatprep.subr.mxu0 0.0
    %112 = vmatpush1.xpose.msra.mxu0 0.0
    %113 = vmatprep.subr.mxu0 0.0
    %114 = vmatpush1.xpose.msra.mxu0 0.0
    %115 = vmatprep.mubr.f32.mxu0 0.0
    %116 = vmatmul.mubr.f32.gmra.mrb[0].mxu0 %v46
    %v117 = vpop.f32.mrb[0].mxu0
    %v118 = vadd.f32 0.0, %v117
    %v119 = vpop.f32.mrb[0].mxu0
    %120 = vmatprep.mubr.f32.mxu0 0.0
    %121 = vmatmul.mubr.f32.gmra.mrb[0].mxu0 %v49
    %v122 = vpop.f32.mrb[0].mxu0
    %v123 = vadd.f32 0.0, %v122
    %v124 = vpop.f32.mrb[0].mxu0
    %125 = vdwg.mxu0
    %s126 = sld [smem:[#allocation2]]
    %v127 = vstv %s126
    %v128 = vrcp.pop %v127
    %s129 = vtos %v128
    %v130 = vstv %s129
    %v131 = vmul.f32 %v118, %v130
    %v132 = vmul.f32 %v123, %v130
    %v133 = vlaneseq
    %v134 = vshrl.u32 %v133, 7
    %v135 = vadd.s32 %v134, 8
    %v136 = vlaneseq
    %v137 = vand.u32 %v136, 127
    %v138 = vadd.s32 %v135, 8
    %vm139 = vcmp.eq.s32.totalorder %v137, %v135
    %vm140 = vcmp.eq.s32.totalorder %v137, %v138
    %v141 = vsub.s32 %v134, 8
    %vm142 = vcmp.eq.s32.totalorder %v137, %v141
    %vm143 = vcmp.eq.s32.totalorder %v137, %v134
    %vm144 = vmor %vm139, %vm142
    %vm145 = vmor %vm140, %vm143
    %vm146 = vcmp.ne.s32.totalorder %v134, %v137
    %vm147 = vcmp.ne.s32.totalorder %v135, %v137
    %v148 = vsel %vm144, %v131, 0.0
    %v149 = vsel %vm145, %v132, 0.0
    %vm150 = vcmask 130048
    %v151 = vsel %vm150, %v148, 0.0
    %152 = vadd.xlane.f32.xlu0 %v151
    %v153 = vpop.xlane.xlu0 %152
    %v154 = vsel %vm150, %v149, 0.0
    %155 = vadd.xlane.f32.xlu0 %v154
    %v156 = vpop.xlane.xlu0 %155
    %v157 = vmul.f32 %v131, 1.442695
    %v158 = vpow.pop %v157
    %v159 = vmul.f32 %v132, 1.442695
    %v160 = vpow.pop %v159
    %v161 = vsel %vm146, %v158, 0.0
    %v162 = vsel %vm147, %v160, 0.0
    %v163 = vsel %vm150, %v161, 0.0
    %164 = vadd.xlane.f32.xlu0 %v163
    %v165 = vpop.xlane.xlu0 %164
    %v166 = vsel %vm150, %v162, 0.0
    %167 = vadd.xlane.f32.xlu0 %v166
    %v168 = vpop.xlane.xlu0 %167
    %v169 = vlog2.pop %v165
    %v170 = vmul.f32 %v169, 0.6931472
    %v171 = vlog2.pop %v168
    %v172 = vmul.f32 %v171, 0.6931472
    %v173 = vsub.f32 %v170, %v153
    %v174 = vsub.f32 %v172, %v156
    %v175 = vadd.f32 %v173, %v174
    %v176 = vrot.slane %v175, 4
    %v177 = vadd.f32 %v175, %v176
    %v178 = vrot.slane %v177, 2
    %v179 = vadd.f32 %v177, %v178
    %v180 = vrot.slane %v179, 1
    %v181 = vadd.f32 %v179, %v180
    %v182 = vmul.f32 %v181, 0.0625
    %vm183 = vcmask 0
    %184 = vst.msk [vmem:[#allocation6] sm:$0x1] %vm183, %v182
    // Predicated region
    $region18: #{contrastive_loss.1} parent=1 // pred_check
      _
    $region19: #{contrastive_loss.1} parent=1 // pred_check_branch
      %186 = sbr.rel (0) target = $region21
    $region20: #{contrastive_loss.1} parent=1 // pred_region
      %s188 = ssub.s32 16, 16
      %189 = vsyncadd [#allocation5], %s188
      %s191 = sshll.u32 [#allocation6], 4
      %s192 = int_to_ptr.vmem [resolvable:$true] %s191
      %194 = dma.vmem_to_hbm [thread:$0]  %s192, 16, %s3, [#allocation5]
    $region21: #{contrastive_loss.1} parent=1 // pred_fallthru
      _
    // Predicated region
    $region22: #{contrastive_loss.1} parent=1 // pred_check
      _
    $region23: #{contrastive_loss.1} parent=1 // pred_check_branch
      %196 = sbr.rel (0) target = $region25
    $region24: #{contrastive_loss.1} parent=1 // pred_region
      %197 = dma.done [#allocation5], 16
    $region25: #{contrastive_loss.1} parent=1 // pred_fallthru
      _
    %198 = vsyncpa [#allocation4], 1
    %199 = vsyncpa [#allocation5], 1

</llo_original>
